<compile_context>
chip_gen: v7x
topology: tpu7x:2x2x1
jax: 0.10.0
libtpu: 0.0.40
codegen_flags: <defaults>
</compile_context>

<pallas_src>
import math

import jax
import jax.numpy as jnp
from jax import lax
from jax.experimental import pallas as pl
from jax.experimental.pallas import tpu as pltpu


def _round_up(x, m):
    return ((x + m - 1) // m) * m


def _pick_divisor_tile(total, want, mult):
    """Largest divisor of `total` that is <= `want` and a multiple of `mult`;
    falls back to `total` (full extent) when no such divisor exists."""
    best = None
    for cand in range(mult, min(want, total) + 1, mult):
        if total % cand == 0:
            best = cand
    return best if best is not None else total


def _pick_vmem_limit(default_bytes=48 * 1024 * 1024):
    # v7x has only 64 MiB physical VMEM per TensorCore -- never request all of
    # it; on v5e/v6e 48 MiB is comfortably below physical but well above the
    # 16/32 MiB scoped defaults.
    try:
        phys = int(pltpu.get_tpu_info().vmem_capacity_bytes)
        return int(min(default_bytes, (phys * 3) // 4))
    except Exception:
        return default_bytes


def _layernorm_f32(y, gamma, beta, eps):
    """Stable two-pass LayerNorm in f32; rsqrt goes to the EUP slot."""
    mean = jnp.mean(y, axis=-1, keepdims=True)
    c = y - mean
    var = jnp.mean(c * c, axis=-1, keepdims=True)
    inv = lax.rsqrt(var + eps)
    return c * inv * gamma + beta


# ----------------------------------------------------------------------------
# Parameter preparation (done once, outside the forward path)
# ----------------------------------------------------------------------------
def prepare_params(params, *, mm_dtype=jnp.float32, act_dtype=jnp.float32):
    """Cast/reshape the parameter tree once: matmul weights -> mm_dtype,
    biases / LN params -> f32 row vectors, embedding tables -> act_dtype."""
    vec = lambda v: v.reshape(1, -1).astype(jnp.float32)
    out = {
        "tok_table": params["tok_table"].astype(act_dtype),
        "sent_table": params["sent_table"].astype(act_dtype),
        "pos_table": params["pos_table"].astype(act_dtype),
        "emb_gamma": vec(params["emb_gamma"]),
        "emb_beta": vec(params["emb_beta"]),
        "layers": [],
    }
    for p in params["layers"]:
        out["layers"].append({
            "wq": p["wq"].astype(mm_dtype), "bq": vec(p["bq"]),
            "wk": p["wk"].astype(mm_dtype), "bk": vec(p["bk"]),
            "wv": p["wv"].astype(mm_dtype), "bv": vec(p["bv"]),
            "wo": p["wo"].astype(mm_dtype), "bo": vec(p["bo"]),
            "ln_gamma": vec(p["ln_gamma"]), "ln_beta": vec(p["ln_beta"]),
            "w1": p["w1"].astype(mm_dtype), "fb1": vec(p["fb1"]),
            "w2": p["w2"].astype(mm_dtype), "fb2": vec(p["fb2"]),
            "ffn_gamma": vec(p["ffn_gamma"]), "ffn_beta": vec(p["ffn_beta"]),
        })
    return out


# ----------------------------------------------------------------------------
# Embedding: (tok + sent + pos) -> LayerNorm   (gather done in the wrapper)
# ----------------------------------------------------------------------------
def _emb_ln_kernel(eps):
    def kernel(t_ref, s_ref, p_ref, gamma_ref, beta_ref, o_ref):
        y = (t_ref[...].astype(jnp.float32)
             + s_ref[...].astype(jnp.float32)
             + p_ref[...].astype(jnp.float32))
        o_ref[...] = _layernorm_f32(y, gamma_ref[...], beta_ref[...], eps).astype(o_ref.dtype)
    return kernel


def embedding_layer(token_ip, sent_ip, pos_ip, prepared, *, eps=1e-12, tm=512):
    # TODO(synk): the embedding-table gather is data-dependent; it is done with
    # jnp.take on act_dtype tables in the wrapper (bf16 path halves the staged
    # traffic) and only sum+LayerNorm run in Pallas.  A scalar-prefetch +
    # in-kernel DMA gather would remove the remaining (M, E) staging arrays.
    tok_table = prepared["tok_table"]
    B, S = token_ip.shape
    E = tok_table.shape[1]
    M = B * S
    act_dtype = tok_table.dtype

    tok = jnp.take(tok_table, token_ip.reshape(-1), axis=0)
    sen = jnp.take(prepared["sent_table"], sent_ip.reshape(-1), axis=0)
    pos = jnp.take(prepared["pos_table"], pos_ip.reshape(-1), axis=0)

    tm_eff = _round_up(min(tm, _round_up(M, 8)), 8)
    M_pad = _round_up(M, tm_eff)
    if M_pad != M:
        pad = ((0, M_pad - M), (0, 0))
        tok, sen, pos = jnp.pad(tok, pad), jnp.pad(sen, pad), jnp.pad(pos, pad)

    out2d = pl.pallas_call(
        _emb_ln_kernel(eps),
        out_shape=jax.ShapeDtypeStruct((M_pad, E), act_dtype),
        grid_spec=pltpu.PrefetchScalarGridSpec(
            num_scalar_prefetch=0,
            grid=(M_pad // tm_eff,),
            in_specs=[pl.BlockSpec((tm_eff, E), lambda i: (i, 0))] * 3
                     + [pl.BlockSpec((1, E), lambda i: (0, 0))] * 2,
            out_specs=pl.BlockSpec((tm_eff, E), lambda i: (i, 0)),
        ),
        compiler_params=pltpu.CompilerParams(dimension_semantics=("parallel",)),
    )(tok, sen, pos, prepared["emb_gamma"], prepared["emb_beta"])

    return out2d[:M].reshape(B, S, E)


# ----------------------------------------------------------------------------
# Fused multi-head self-attention + residual + LayerNorm
# grid = (B, S // tq): K/V computed once per batch element into VMEM scratch,
# each q-tile attends against them; per-head results land in a z-slab scratch.
# ----------------------------------------------------------------------------
def _attn_kernel(eps, num_heads, head_dim, tq, mm_dtype, approx_recip):
    scale = 1.0 / math.sqrt(head_dim)

    def kernel(x_ref, wq_ref, bq_ref, wk_ref, bk_ref, wv_ref, bv_ref,
               wo_ref, bo_ref, gamma_ref, beta_ref, o_ref,
               k_scr, v_scr, z_scr):
        qi = pl.program_id(1)

        # K/V projections once per batch element; persist in scratch across q-tiles.
        @pl.when(qi == 0)
        def _():
            xf = x_ref[0].astype(mm_dtype)                                 # (S, E)
            k = jnp.dot(xf, wk_ref[...], preferred_element_type=jnp.float32) + bk_ref[...]
            v = jnp.dot(xf, wv_ref[...], preferred_element_type=jnp.float32) + bv_ref[...]
            k_scr[...] = k.astype(k_scr.dtype)
            v_scr[...] = v.astype(v_scr.dtype)

        q0 = pl.multiple_of(qi * tq, 8)
        x_rows = x_ref[0, pl.ds(q0, tq), :]                                # (tq, E)
        x_f32 = x_rows.astype(jnp.float32)

        q = jnp.dot(x_rows.astype(mm_dtype), wq_ref[...],
                    preferred_element_type=jnp.float32) + bq_ref[...]
        q = (q * scale).astype(mm_dtype)            # fold 1/sqrt(head_dim) into q

        # Static unroll over heads; no .T, no list+concatenate.
        for h in range(num_heads):
            lo = h * head_dim
            qh = q[:, lo:lo + head_dim]                                    # (tq, hd)
            kh = k_scr[:, lo:lo + head_dim]                                # (S, hd)
            vh = v_scr[:, lo:lo + head_dim]                                # (S, hd)
            s = lax.dot_general(qh, kh, (((1,), (1,)), ((), ())),
                                preferred_element_type=jnp.float32)        # (tq, S)
            s = s - jnp.max(s, axis=-1, keepdims=True)
            p = jnp.exp(s)
            p = p * pl.reciprocal(jnp.sum(p, axis=-1, keepdims=True),
                                  approx=approx_recip)
            z_scr[:, lo:lo + head_dim] = jnp.dot(
                p.astype(mm_dtype), vh,
                preferred_element_type=jnp.float32).astype(z_scr.dtype)

        attn = jnp.dot(z_scr[...].astype(mm_dtype), wo_ref[...],
                       preferred_element_type=jnp.float32) + bo_ref[...]
        y = x_f32 + attn                              # residual (dropout = identity)
        o_ref[0] = _layernorm_f32(y, gamma_ref[...], beta_ref[...], eps).astype(o_ref.dtype)

    return kernel


def attention_block(x, p, *, eps, num_heads, tq=256, vmem_limit_bytes=None):
    B, S, E = x.shape
    head_dim = E // num_heads
    mm_dtype = p["wq"].dtype
    approx_recip = jnp.dtype(mm_dtype) != jnp.dtype(jnp.float32)
    tq_eff = _pick_divisor_tile(S, tq, 8)
    n_q = S // tq_eff
    if vmem_limit_bytes is None:
        vmem_limit_bytes = _pick_vmem_limit()

    # TODO(synk): on v5e, single-buffering these constant-index weight blocks
    # (pipeline_mode=pl.Buffered(1)) would halve their VMEM footprint; kept on
    # default buffering here for maximal lowering compatibility.
    w_spec = pl.BlockSpec((E, E), lambda b, qi: (0, 0))
    v_spec = pl.BlockSpec((1, E), lambda b, qi: (0, 0))

    return pl.pallas_call(
        _attn_kernel(eps, num_heads, head_dim, tq_eff, mm_dtype, approx_recip),
        out_shape=jax.ShapeDtypeStruct((B, S, E), x.dtype),
        grid_spec=pltpu.PrefetchScalarGridSpec(
            num_scalar_prefetch=0,
            grid=(B, n_q),
            in_specs=[
                pl.BlockSpec((1, S, E), lambda b, qi: (b, 0, 0)),   # x (full seq per b)
                w_spec, v_spec,                                     # wq, bq
                w_spec, v_spec,                                     # wk, bk
                w_spec, v_spec,                                     # wv, bv
                w_spec, v_spec,                                     # wo, bo
                v_spec, v_spec,                                     # gamma, beta
            ],
            out_specs=pl.BlockSpec((1, tq_eff, E), lambda b, qi: (b, qi, 0)),
            scratch_shapes=[pltpu.VMEM((S, E), mm_dtype),           # K
                            pltpu.VMEM((S, E), mm_dtype),           # V
                            pltpu.VMEM((tq_eff, E), jnp.float32)],  # per-head Z slab
        ),
        compiler_params=pltpu.CompilerParams(
            dimension_semantics=("parallel", "arbitrary"),
            vmem_limit_bytes=vmem_limit_bytes),
    )(x, p["wq"], p["bq"], p["wk"], p["bk"], p["wv"], p["bv"],
      p["wo"], p["bo"], p["ln_gamma"], p["ln_beta"])


# ----------------------------------------------------------------------------
# FeedForward: fc1 -> GELU -> fc2 -> (+residual) -> LayerNorm
# H-tiled reduction with an f32 accumulator; activations stay in act dtype.
# ----------------------------------------------------------------------------
def _ffn_kernel(eps, mm_dtype):
    c = math.sqrt(2.0 / math.pi)

    def kernel(x_ref, w1_ref, b1_ref, w2_ref, b2_ref, gamma_ref, beta_ref,
               o_ref, acc_ref):
        kh = pl.program_id(1)

        @pl.when(kh == 0)
        def _():
            acc_ref[...] = jnp.zeros_like(acc_ref)

        x_act = x_ref[...]                                     # (tm, E) activation dtype

        # fc1 slice: (tm, E) @ (E, th) -> (tm, th), f32 accumulation on the MXU
        h = jnp.dot(x_act.astype(mm_dtype), w1_ref[...],
                    preferred_element_type=jnp.float32) + b1_ref[...]
        # GELU (tanh approximation, as in the PyTorch module), f32 VPU/EUP
        g = 0.5 * h * (1.0 + jnp.tanh(c * (h + 0.044715 * h * h * h)))
        # fc2 slice contributes a partial sum into the resident accumulator
        acc_ref[...] += jnp.dot(g.astype(mm_dtype), w2_ref[...],
                                preferred_element_type=jnp.float32)

        @pl.when(kh == pl.num_programs(1) - 1)
        def _():
            y = acc_ref[...] + b2_ref[...] + x_ref[...].astype(jnp.float32)
            o_ref[...] = _layernorm_f32(y, gamma_ref[...], beta_ref[...], eps).astype(o_ref.dtype)

    return kernel


def feed_forward_layer(x, w1, b1, w2, b2, gamma, beta, *, eps=1e-12,
                       tm=512, th=512, vmem_limit_bytes=None):
    """x: (B, S, E). w1: (E, H), w2: (H, E) (pre-transposed to (in, out))."""
    B, S, E = x.shape
    H = w1.shape[1]
    M = B * S
    mm_dtype = w1.dtype

    # Row tile: big (512 default, good for v6e/v7x rooflines); shrink for tiny M.
    tm_eff = _round_up(min(tm, _round_up(M, 8)), 8)
    M_pad = _round_up(M, tm_eff)
    n_m = M_pad // tm_eff
    # Hidden tile: largest 128-multiple divisor of H <= th (never full-H unless H is small).
    th_eff = _pick_divisor_tile(H, th, 128)
    n_h = H // th_eff
    if vmem_limit_bytes is None:
        vmem_limit_bytes = _pick_vmem_limit()

    x2d = x.reshape(M, E)                       # stays in activation dtype (no f32 blow-up)
    if M_pad != M:
        x2d = jnp.pad(x2d, ((0, M_pad - M), (0, 0)))

    w_item = jnp.dtype(mm_dtype).itemsize
    a_item = jnp.dtype(x.dtype).itemsize
    flops = 4 * M_pad * E * H                                  # two matmuls
    transcendentals = M_pad * H                                # tanh
    bytes_accessed = int(2 * M_pad * E * a_item                # x in, out
                         + n_m * 2 * E * H * w_item            # weights re-streamed per row tile
                         + 4 * (H + 3 * E))

    out2d = pl.pallas_call(
        _ffn_kernel(eps, mm_dtype),
        out_shape=jax.ShapeDtypeStruct((M_pad, E), x.dtype),
        grid_spec=pltpu.PrefetchScalarGridSpec(
            num_scalar_prefetch=0,
            grid=(n_m, n_h),
            in_specs=[
                pl.BlockSpec((tm_eff, E), lambda i, kh: (i, 0)),   # x rows
                pl.BlockSpec((E, th_eff), lambda i, kh: (0, kh)),  # W1 column slice
                pl.BlockSpec((1, th_eff), lambda i, kh: (0, kh)),  # b1 slice
                pl.BlockSpec((th_eff, E), lambda i, kh: (kh, 0)),  # W2 row slice
                pl.BlockSpec((1, E), lambda i, kh: (0, 0)),        # b2
                pl.BlockSpec((1, E), lambda i, kh: (0, 0)),        # gamma
                pl.BlockSpec((1, E), lambda i, kh: (0, 0)),        # beta
            ],
            out_specs=pl.BlockSpec((tm_eff, E), lambda i, kh: (i, 0)),
            scratch_shapes=[pltpu.VMEM((tm_eff, E), jnp.float32)],
        ),
        compiler_params=pltpu.CompilerParams(
            dimension_semantics=("parallel", "arbitrary"),
            vmem_limit_bytes=vmem_limit_bytes),
        cost_estimate=pl.CostEstimate(flops=flops,
                                      transcendentals=transcendentals,
                                      bytes_accessed=bytes_accessed),
    )(x2d, w1, b1, w2, b2, gamma, beta)

    return out2d[:M].reshape(B, S, E)


# ----------------------------------------------------------------------------
# Encoder layer / full BERT encoder
# ----------------------------------------------------------------------------
def encoder_layer(x, p, *, eps, num_heads, tq, tm, th):
    x = attention_block(x, p, eps=eps, num_heads=num_heads, tq=tq)
    x = feed_forward_layer(x, p["w1"], p["fb1"], p["w2"], p["fb2"],
                           p["ffn_gamma"], p["ffn_beta"], eps=eps, tm=tm, th=th)
    return x


def bert_encoder(token_ip, sent_ip, pos_ip, prepared, *, eps=1e-12, num_heads=4,
                 tq=256, tm=512, th=512):
    # TODO(synk): optional attention mask not implemented (module default mask=None).
    x = embedding_layer(token_ip, sent_ip, pos_ip, prepared, eps=eps, tm=tm)
    for p in prepared["layers"]:
        x = encoder_layer(x, p, eps=eps, num_heads=num_heads, tq=tq, tm=tm, th=th)
    return x


# ----------------------------------------------------------------------------
# Pure-JAX reference (matches the PyTorch module, dropout = identity)
# ----------------------------------------------------------------------------
def _ln_ref(y, gamma, beta, eps):
    mean = jnp.mean(y, axis=-1, keepdims=True)
    var = jnp.mean((y - mean) ** 2, axis=-1, keepdims=True)
    return (y - mean) / jnp.sqrt(var + eps) * gamma + beta


def bert_reference(token_ip, sent_ip, pos_ip, params, *, eps, num_heads):
    emb = (params["tok_table"][token_ip]
           + params["sent_table"][sent_ip]
           + params["pos_table"][pos_ip])
    x = _ln_ref(emb, params["emb_gamma"], params["emb_beta"], eps)
    c = math.sqrt(2.0 / math.pi)
    for p in params["layers"]:
        B, S, E = x.shape
        hd = E // num_heads
        q = x @ p["wq"] + p["bq"]
        k = x @ p["wk"] + p["bk"]
        v = x @ p["wv"] + p["bv"]
        q = q.reshape(B, S, num_heads, hd).transpose(0, 2, 1, 3)
        k = k.reshape(B, S, num_heads, hd).transpose(0, 2, 1, 3)
        v = v.reshape(B, S, num_heads, hd).transpose(0, 2, 1, 3)
        s = jnp.einsum("bhqd,bhkd->bhqk", q, k) / math.sqrt(hd)
        a = jax.nn.softmax(s, axis=-1)
        z = jnp.einsum("bhqk,bhkd->bhqd", a, v).transpose(0, 2, 1, 3).reshape(B, S, E)
        attn = z @ p["wo"] + p["bo"]
        x = _ln_ref(x + attn, p["ln_gamma"], p["ln_beta"], eps)
        h = x @ p["w1"] + p["fb1"]
        g = 0.5 * h * (1.0 + jnp.tanh(c * (h + 0.044715 * h ** 3)))
        y = g @ p["w2"] + p["fb2"]
        x = _ln_ref(x + y, p["ffn_gamma"], p["ffn_beta"], eps)
    return x


# ----------------------------------------------------------------------------
# Parameter construction
# ----------------------------------------------------------------------------
def _dense(key, fan_in, shape):
    return jax.random.normal(key, shape, dtype=jnp.float32) / math.sqrt(fan_in)


def init_layer_params(key, E, H):
    ks = jax.random.split(key, 16)
    n = lambda k, s, sc=0.02: sc * jax.random.normal(k, s, dtype=jnp.float32)
    return {
        "wq": _dense(ks[0], E, (E, E)), "bq": n(ks[1], (E,)),
        "wk": _dense(ks[2], E, (E, E)), "bk": n(ks[3], (E,)),
        "wv": _dense(ks[4], E, (E, E)), "bv": n(ks[5], (E,)),
        "wo": _dense(ks[6], E, (E, E)), "bo": n(ks[7], (E,)),
        "ln_gamma": 1.0 + n(ks[8], (E,), 0.1), "ln_beta": n(ks[9], (E,)),
        "w1": _dense(ks[10], E, (E, H)), "fb1": n(ks[11], (H,)),
        "w2": _dense(ks[12], H, (H, E)), "fb2": n(ks[13], (E,)),
        "ffn_gamma": 1.0 + n(ks[14], (E,), 0.1), "ffn_beta": n(ks[15], (E,)),
    }


def init_params(key, *, vocab_size, sent_size, pos_size, E, H, num_encoders):
    ks = jax.random.split(key, 5 + num_encoders)
    return {
        "tok_table": 0.5 * jax.random.normal(ks[0], (vocab_size, E), dtype=jnp.float32),
        "sent_table": 0.5 * jax.random.normal(ks[1], (sent_size, E), dtype=jnp.float32),
        "pos_table": 0.5 * jax.random.normal(ks[2], (pos_size, E), dtype=jnp.float32),
        "emb_gamma": 1.0 + 0.1 * jax.random.normal(ks[3], (E,), dtype=jnp.float32),
        "emb_beta": 0.02 * jax.random.normal(ks[4], (E,), dtype=jnp.float32),
        "layers": [init_layer_params(ks[5 + i], E, H) for i in range(num_encoders)],
    }


if __name__ == "__main__":
    # toy config: vocab=100, sent=2, pos=16, emb_dim=32, hidden_dim=64,
    # num_heads=4, num_encoders=2, eps=1e-12, all dropouts identity (eval mode)
    B, S = 2, 8
    VOCAB, SENT, POS = 100, 2, 16
    E, H = 32, 64
    NUM_HEADS, NUM_ENC = 4, 2
    EPS = 1e-12

    key = jax.random.PRNGKey(0)
    kp, kt, ks = jax.random.split(key, 3)

    params = init_params(kp, vocab_size=VOCAB, sent_size=SENT, pos_size=POS,
                         E=E, H=H, num_encoders=NUM_ENC)
    token_ip = jax.random.randint(kt, (B, S), 0, VOCAB, dtype=jnp.int32)
    sent_ip = jax.random.randint(ks, (B, S), 0, SENT, dtype=jnp.int32)
    pos_ip = jnp.broadcast_to(jnp.arange(S, dtype=jnp.int32), (B, S))

    ref = bert_reference(token_ip, sent_ip, pos_ip, params, eps=EPS, num_heads=NUM_HEADS)

    # f32 matmul / f32 activation path: tight correctness check
    prep_f32 = prepare_params(params, mm_dtype=jnp.float32, act_dtype=jnp.float32)
    out_f32 = bert_encoder(token_ip, sent_ip, pos_ip, prep_f32, eps=EPS, num_heads=NUM_HEADS)
    out_f32 = jax.block_until_ready(out_f32)
    assert out_f32.shape == (B, S, E)
    assert jnp.allclose(out_f32, ref, atol=2e-3, rtol=2e-3), "f32 kernel mismatch vs reference"

    # bf16 matmul operands + bf16 inter-layer activations (f32 accumulation): perf path
    prep_bf16 = prepare_params(params, mm_dtype=jnp.bfloat16, act_dtype=jnp.bfloat16)
    out_bf16 = bert_encoder(token_ip, sent_ip, pos_ip, prep_bf16, eps=EPS, num_heads=NUM_HEADS)
    out_bf16 = jax.block_until_ready(out_bf16)
    assert bool(jnp.all(jnp.isfinite(out_bf16.astype(jnp.float32))))
    assert float(jnp.max(jnp.abs(out_bf16.astype(jnp.float32) - ref))) < 0.3, \
        "bf16 kernel diverged from reference"

    print("KERNEL_OK")
</pallas_src>

<mosaic_0001>
module attributes {stable_mosaic.version = 11 : i64} {
  func.func @kernel(%arg0: i32, %arg1: memref<16x32xf32, #tpu.memory_space<vmem>>, %arg2: memref<16x32xf32, #tpu.memory_space<vmem>>, %arg3: memref<16x32xf32, #tpu.memory_space<vmem>>, %arg4: memref<1x32xf32, #tpu.memory_space<vmem>>, %arg5: memref<1x32xf32, #tpu.memory_space<vmem>>, %arg6: memref<16x32xf32, #tpu.memory_space<vmem>>) attributes {dimension_semantics = [#tpu.dimension_semantics<parallel>], iteration_bounds = array<i64: 1>, scalar_prefetch = 0 : i64, scratch_operands = 0 : i64, tpu.core_type = #tpu.core_type<tc>, window_params = [{transform_indices = @transform_0, window_bounds = array<i64: 16, 32>}, {transform_indices = @transform_1, window_bounds = array<i64: 16, 32>}, {transform_indices = @transform_2, window_bounds = array<i64: 16, 32>}, {pipeline_mode = #tpu.pipeline_mode<synchronous>, transform_indices = @transform_3, window_bounds = array<i64: 1, 32>}, {pipeline_mode = #tpu.pipeline_mode<synchronous>, transform_indices = @transform_4, window_bounds = array<i64: 1, 32>}, {transform_indices = @transform_5, window_bounds = array<i64: 16, 32>}]} {
    %c0 = arith.constant 0 : index
    %c0_0 = arith.constant 0 : index
    %0 = vector.load %arg1[%c0, %c0_0] : memref<16x32xf32, #tpu.memory_space<vmem>>, vector<16x32xf32>
    %c0_1 = arith.constant 0 : index
    %c0_2 = arith.constant 0 : index
    %1 = vector.load %arg2[%c0_1, %c0_2] : memref<16x32xf32, #tpu.memory_space<vmem>>, vector<16x32xf32>
    %2 = arith.addf %0, %1 : vector<16x32xf32>
    %c0_3 = arith.constant 0 : index
    %c0_4 = arith.constant 0 : index
    %3 = vector.load %arg3[%c0_3, %c0_4] : memref<16x32xf32, #tpu.memory_space<vmem>>, vector<16x32xf32>
    %4 = arith.addf %2, %3 : vector<16x32xf32>
    %c0_5 = arith.constant 0 : index
    %c0_6 = arith.constant 0 : index
    %5 = vector.load %arg4[%c0_5, %c0_6] : memref<1x32xf32, #tpu.memory_space<vmem>>, vector<1x32xf32>
    %c0_7 = arith.constant 0 : index
    %c0_8 = arith.constant 0 : index
    %6 = vector.load %arg5[%c0_7, %c0_8] : memref<1x32xf32, #tpu.memory_space<vmem>>, vector<1x32xf32>
    %cst = arith.constant dense<0.000000e+00> : vector<16xf32>
    %7 = vector.multi_reduction <add>, %4, %cst [1] : vector<16x32xf32> to vector<16xf32>
    %8 = vector.shape_cast %7 : vector<16xf32> to vector<16x1xf32>
    %cst_9 = arith.constant 3.200000e+01 : f32
    %9 = vector.broadcast %cst_9 : f32 to vector<16x1xf32>
    %10 = arith.divf %8, %9 : vector<16x1xf32>
    %11 = vector.broadcast %10 : vector<16x1xf32> to vector<16x32xf32>
    %12 = arith.subf %4, %11 : vector<16x32xf32>
    %13 = arith.mulf %12, %12 : vector<16x32xf32>
    %cst_10 = arith.constant dense<0.000000e+00> : vector<16xf32>
    %14 = vector.multi_reduction <add>, %13, %cst_10 [1] : vector<16x32xf32> to vector<16xf32>
    %15 = vector.shape_cast %14 : vector<16xf32> to vector<16x1xf32>
    %cst_11 = arith.constant 3.200000e+01 : f32
    %16 = vector.broadcast %cst_11 : f32 to vector<16x1xf32>
    %17 = arith.divf %15, %16 : vector<16x1xf32>
    %cst_12 = arith.constant 9.99999996E-13 : f32
    %18 = vector.broadcast %cst_12 : f32 to vector<16x1xf32>
    %19 = arith.addf %17, %18 : vector<16x1xf32>
    %20 = math.rsqrt %19 : vector<16x1xf32>
    %21 = vector.broadcast %20 : vector<16x1xf32> to vector<16x32xf32>
    %22 = arith.mulf %12, %21 : vector<16x32xf32>
    %23 = vector.broadcast %5 : vector<1x32xf32> to vector<16x32xf32>
    %24 = arith.mulf %22, %23 : vector<16x32xf32>
    %25 = vector.broadcast %6 : vector<1x32xf32> to vector<16x32xf32>
    %26 = arith.addf %24, %25 : vector<16x32xf32>
    %c0_13 = arith.constant 0 : index
    %c0_14 = arith.constant 0 : index
    %27 = vector.load %arg6[%c0_13, %c0_14] : memref<16x32xf32, #tpu.memory_space<vmem>>, vector<16x32xf32>
    tpu.vector_store %arg6[%c0_13, %c0_14], %26 {strides = array<i32>} : memref<16x32xf32, #tpu.memory_space<vmem>>, vector<16x32xf32>,
    return
  }
  func.func @transform_0(%arg0: i32) -> (i32, i32) {
    %c0_i32 = arith.constant 0 : i32
    %c0_i32_0 = arith.constant 0 : i32
    return %arg0, %c0_i32 : i32, i32
  }
  func.func @transform_1(%arg0: i32) -> (i32, i32) {
    %c0_i32 = arith.constant 0 : i32
    %c0_i32_0 = arith.constant 0 : i32
    return %arg0, %c0_i32 : i32, i32
  }
  func.func @transform_2(%arg0: i32) -> (i32, i32) {
    %c0_i32 = arith.constant 0 : i32
    %c0_i32_0 = arith.constant 0 : i32
    return %arg0, %c0_i32 : i32, i32
  }
  func.func @transform_3(%arg0: i32) -> (i32, i32) {
    %c0_i32 = arith.constant 0 : i32
    %c0_i32_0 = arith.constant 0 : i32
    %c0_i32_1 = arith.constant 0 : i32
    return %c0_i32, %c0_i32_0 : i32, i32
  }
  func.func @transform_4(%arg0: i32) -> (i32, i32) {
    %c0_i32 = arith.constant 0 : i32
    %c0_i32_0 = arith.constant 0 : i32
    %c0_i32_1 = arith.constant 0 : i32
    return %c0_i32, %c0_i32_0 : i32, i32
  }
  func.func @transform_5(%arg0: i32) -> (i32, i32) {
    %c0_i32 = arith.constant 0 : i32
    %c0_i32_0 = arith.constant 0 : i32
    return %arg0, %c0_i32 : i32, i32
  }
}

</mosaic_0001>

<llo_original>
// kernel: tpu_custom_call.1
$region0: #{tpu_custom_call.1}
  #allocation0 [shape = 'u32[]', space=smem, size = 0x4, offset = 0x4, fixed_abs, tag = 'smem constant byte address 0x4 - core index']
  #allocation1 [shape = 'u32[144,128]{1,0:T(1,128)}', space=vmem, size = 0x12000, scoped, tag = 'internal scratch']
  %s0 = inlined_call_operand.hbm [shape: f32[16,32], index: 0, kind: input, shape index: {}]
  %s1 = inlined_call_operand.hbm [shape: f32[16,32], index: 1, kind: input, shape index: {}]
  %s2 = inlined_call_operand.hbm [shape: f32[16,32], index: 2, kind: input, shape index: {}]
  %s3 = inlined_call_operand.vmem [shape: f32[1,32], index: 3, kind: input, shape index: {}]
  %s4 = inlined_call_operand.vmem [shape: f32[1,32], index: 4, kind: input, shape index: {}]
  %s5 = inlined_call_operand.hbm [shape: f32[16,32], index: 5, kind: output, shape index: {}]
  %s6 = sld [smem:[#allocation0]]
  $region42: #{tpu_custom_call.1} parent=0
    _
  %s8 = ssub.s32 1, %s6
  %s9 = scalar_select 0, %s8, %s6
  $region1: #{tpu_custom_call.1} parent=0
    #allocation2 [shape = 'u8[8192]{0}', space=vmem, size = 0x2000, scoped, tag = 'input window, operand 0, single buffered']
    #allocation3 [shape = 's32[1]{0}', space=sflag, size = 0x4, scoped, tag = 'scoped memory for tpu_custom_call.1']
    #allocation4 [shape = 's32[1]{0}', space=sflag, size = 0x4, scoped, tag = 'scoped memory for tpu_custom_call.1']
    #allocation5 [shape = 'u8[8192]{0}', space=vmem, size = 0x2000, scoped, tag = 'input window, operand 1, single buffered']
    #allocation6 [shape = 's32[1]{0}', space=sflag, size = 0x4, scoped, tag = 'scoped memory for tpu_custom_call.1']
    #allocation7 [shape = 'u8[8192]{0}', space=vmem, size = 0x2000, scoped, tag = 'input window, operand 2, single buffered']
    #allocation8 [shape = 'u8[8192]{0}', space=vmem, size = 0x2000, scoped, tag = 'output window, operand 0, single buffered']
    %10 = vsyncpa [#allocation3], 0
    %11 = vsyncpa [#allocation6], 0
    %12 = vsyncpa [#allocation4], 0
    // Predicated region
    $region2: #{tpu_custom_call.1} parent=1 // pred_check
      _
    $region3: #{tpu_custom_call.1} parent=1 // pred_check_branch
      %14 = sbr.rel (0) target = $region5
    $region4: #{tpu_custom_call.1} parent=1 // pred_region
      %s16 = ssub.s32 256, 256
      %17 = vsyncadd [#allocation3], %s16
      %s18 = sshll.u32 [#allocation2], 4
      %s19 = int_to_ptr.vmem [resolvable:$true] %s18
      %24 = dma.hbm_to_vmem [thread:$0]  %s0, 256, %s19, [#allocation3], 128, 128, 8
    $region5: #{tpu_custom_call.1} parent=1 // pred_fallthru
      _
    // Predicated region
    $region6: #{tpu_custom_call.1} parent=1 // pred_check
      _
    $region7: #{tpu_custom_call.1} parent=1 // pred_check_branch
      %26 = sbr.rel (0) target = $region9
    $region8: #{tpu_custom_call.1} parent=1 // pred_region
      %s28 = ssub.s32 256, 256
      %29 = vsyncadd [#allocation6], %s28
      %s30 = sshll.u32 [#allocation5], 4
      %s31 = int_to_ptr.vmem [resolvable:$true] %s30
      %36 = dma.hbm_to_vmem [thread:$0]  %s1, 256, %s31, [#allocation6], 128, 128, 8
    $region9: #{tpu_custom_call.1} parent=1 // pred_fallthru
      _
    // Predicated region
    $region10: #{tpu_custom_call.1} parent=1 // pred_check
      _
    $region11: #{tpu_custom_call.1} parent=1 // pred_check_branch
      %38 = sbr.rel (0) target = $region13
    $region12: #{tpu_custom_call.1} parent=1 // pred_region
      %s40 = ssub.s32 256, 256
      %41 = vsyncadd [#allocation6], %s40
      %s42 = sshll.u32 [#allocation7], 4
      %s43 = int_to_ptr.vmem [resolvable:$true] %s42
      %48 = dma.hbm_to_vmem [thread:$0]  %s2, 256, %s43, [#allocation6], 128, 128, 8
    $region13: #{tpu_custom_call.1} parent=1 // pred_fallthru
      _
    // Predicated region
    $region14: #{tpu_custom_call.1} parent=1 // pred_check
      _
    $region15: #{tpu_custom_call.1} parent=1 // pred_check_branch
      %50 = sbr.rel (0) target = $region17
    $region16: #{tpu_custom_call.1} parent=1 // pred_region
      _
    $region17: #{tpu_custom_call.1} parent=1 // pred_fallthru
      _
    // Predicated region
    $region18: #{tpu_custom_call.1} parent=1 // pred_check
      _
    $region19: #{tpu_custom_call.1} parent=1 // pred_check_branch
      %52 = sbr.rel (0) target = $region21
    $region20: #{tpu_custom_call.1} parent=1 // pred_region
      _
    $region21: #{tpu_custom_call.1} parent=1 // pred_fallthru
      _
    // Predicated region
    $region22: #{tpu_custom_call.1} parent=1 // pred_check
      _
    $region23: #{tpu_custom_call.1} parent=1 // pred_check_branch
      %54 = sbr.rel (0) target = $region25
    $region24: #{tpu_custom_call.1} parent=1 // pred_region
      %55 = dma.done [#allocation3], 256
    $region25: #{tpu_custom_call.1} parent=1 // pred_fallthru
      _
    // Predicated region
    $region26: #{tpu_custom_call.1} parent=1 // pred_check
      _
    $region27: #{tpu_custom_call.1} parent=1 // pred_check_branch
      %57 = sbr.rel (0) target = $region29
    $region28: #{tpu_custom_call.1} parent=1 // pred_region
      %58 = dma.done [#allocation6], 256
    $region29: #{tpu_custom_call.1} parent=1 // pred_fallthru
      _
    // Predicated region
    $region30: #{tpu_custom_call.1} parent=1 // pred_check
      _
    $region31: #{tpu_custom_call.1} parent=1 // pred_check_branch
      %60 = sbr.rel (0) target = $region33
    $region32: #{tpu_custom_call.1} parent=1 // pred_region
      %61 = dma.done [#allocation6], 256
    $region33: #{tpu_custom_call.1} parent=1 // pred_fallthru
      _
    %v62 = vld [vmem:[#allocation2] sm:$0xff]
    %v63 = vld [vmem:[#allocation2 + $0x8] sm:$0xff]
    %v64 = vld [vmem:[#allocation5] sm:$0xff]
    %v65 = vld [vmem:[#allocation5 + $0x8] sm:$0xff]
    %v66 = vadd.f32 %v62, %v64
    %v67 = vadd.f32 %v63, %v65
    %v68 = vld [vmem:[#allocation7] sm:$0xff]
    %v69 = vld [vmem:[#allocation7 + $0x8] sm:$0xff]
    %v70 = vadd.f32 %v66, %v68
    %v71 = vadd.f32 %v67, %v69
    %v72 = vld [vmem:[%s3] sm:$0x1]
    %v73 = vld [vmem:[%s4] sm:$0x1]
    %vm74 = vcmask 261120
    %v75 = vsel %vm74, %v70, 0.0
    %76 = vadd.xlane.f32.xlu0 %v75
    %v77 = vpop.xlane.xlu0 %76
    %v78 = vsel %vm74, %v71, 0.0
    %79 = vadd.xlane.f32.xlu0 %v78
    %v80 = vpop.xlane.xlu0 %79
    %v81 = vrcp.pop 32.0
    %v82 = vmul.f32 %v77, %v81
    %v83 = vmul.f32 %v80, %v81
    %v84 = vsub.f32 %v70, %v82
    %v85 = vsub.f32 %v71, %v83
    %v86 = vmul.f32 %v84, %v84
    %v87 = vmul.f32 %v85, %v85
    %v88 = vsel %vm74, %v86, 0.0
    %89 = vadd.xlane.f32.xlu0 %v88
    %v90 = vpop.xlane.xlu0 %89
    %v91 = vsel %vm74, %v87, 0.0
    %92 = vadd.xlane.f32.xlu0 %v91
    %v93 = vpop.xlane.xlu0 %92
    %v94 = vmul.f32 %v90, %v81
    %v95 = vmul.f32 %v93, %v81
    %v96 = vadd.f32 %v94, 1e-12
    %v97 = vadd.f32 %v95, 1e-12
    %v98 = vrsqrt.pop %v96
    %v99 = vrsqrt.pop %v97
    %v100 = vmul.f32 %v84, %v98
    %v101 = vmul.f32 %v85, %v99
    %v103 = vlaneseq
    %v104 = vshrl.u32 %v103, 7
    %v105 = vsub.s32 0, %v104
    %v106 = vrot.slane %v72, %v105
    %v108 = vmul.f32 %v100, %v106
    %v109 = vmul.f32 %v101, %v106
    %v111 = vlaneseq
    %v112 = vshrl.u32 %v111, 7
    %v113 = vsub.s32 0, %v112
    %v114 = vrot.slane %v73, %v113
    %v116 = vadd.f32 %v108, %v114
    %v117 = vadd.f32 %v109, %v114
    %118 = vst.msk [vmem:[#allocation8] sm:$0xff] %vm74, %v116
    %119 = vst.msk [vmem:[#allocation8 + $0x8] sm:$0xff] %vm74, %v117
    // Predicated region
    $region34: #{tpu_custom_call.1} parent=1 // pred_check
      _
    $region35: #{tpu_custom_call.1} parent=1 // pred_check_branch
      %121 = sbr.rel (0) target = $region37
    $region36: #{tpu_custom_call.1} parent=1 // pred_region
      %s123 = ssub.s32 256, 256
      %124 = vsyncadd [#allocation4], %s123
      %s125 = sshll.u32 [#allocation8], 4
      %s126 = int_to_ptr.vmem [resolvable:$true] %s125
      %131 = dma.vmem_to_hbm [thread:$0]  %s126, 256, %s5, [#allocation4], 128, 128, 8
    $region37: #{tpu_custom_call.1} parent=1 // pred_fallthru
      _
    // Predicated region
    $region38: #{tpu_custom_call.1} parent=1 // pred_check
      _
    $region39: #{tpu_custom_call.1} parent=1 // pred_check_branch
      %133 = sbr.rel (0) target = $region41
    $region40: #{tpu_custom_call.1} parent=1 // pred_region
      %134 = dma.done [#allocation4], 256
    $region41: #{tpu_custom_call.1} parent=1 // pred_fallthru
      _
    %135 = vsyncpa [#allocation3], 1
    %136 = vsyncpa [#allocation6], 1
    %137 = vsyncpa [#allocation4], 1

</llo_original>
